<compile_context>
chip_gen: v5e
topology: v5e:2x2
jax: 0.10.0
libtpu: 0.0.40
codegen_flags: <defaults>
</compile_context>

<pallas_src>
import functools

import jax
import jax.numpy as jnp
from jax.experimental import pallas as pl
from jax.experimental.pallas import tpu as pltpu

BN_EPS = 1e-5


# --------------------------------------------------------------------------
# Pallas kernels
# --------------------------------------------------------------------------
def _deconv_stats_kernel(p_ref, w_ref, y_ref, s1_ref, s2_ref):
    """Per (phase, M-tile) block: y = W_phase @ patches, plus per-channel
    partial sum / sum-of-squares for the batch-norm statistics.

    p_ref : (1, K, TM)      patches (K on sublanes, TM lane-dense)
    w_ref : (1, Cout, K)    per-phase weight matrix
    y_ref : (1, Cout, TM)   pre-BN conv output
    s1_ref: (1, 1, Cout, 1) partial per-channel sum
    s2_ref: (1, 1, Cout, 1) partial per-channel sum of squares
    """
    y = jax.lax.dot_general(
        w_ref[0], p_ref[0],
        dimension_numbers=(((1,), (0,)), ((), ())),
        preferred_element_type=jnp.float32)            # (Cout, TM) on the MXU
    y_ref[0] = y
    # Lane-axis reductions on a tiny (Cout, TM) tile; XLU work, negligible.
    s1_ref[0, 0] = jnp.sum(y, axis=1, keepdims=True)
    s2_ref[0, 0] = jnp.sum(y * y, axis=1, keepdims=True)


def _bn_act_kernel(y_ref, sc_ref, sh_ref, o_ref, *, apply_act):
    """Folded BN affine (+ optional ReLU): out = max(y*scale + shift, 0)."""
    y = y_ref[0] * sc_ref[...] + sh_ref[...]           # (Cout,TM)*(Cout,1)+(Cout,1)
    if apply_act:
        y = jnp.maximum(y, 0.0)
    o_ref[0] = y


# --------------------------------------------------------------------------
# Sub-pixel (phase) decomposition of ConvTranspose2d
# --------------------------------------------------------------------------
def _phase_offsets(k, s, p):
    """For each output phase ph, the list of (input-row offset e, flipped-kernel
    tap kh') pairs that contribute (all other taps hit structural zeros)."""
    lo = k - 1 - p
    q = k // s
    offs = []
    for ph in range(s):
        r = (lo - ph) % s
        d0 = (ph + r - lo) // s          # exact division
        offs.append([(d0 + t, r + s * t) for t in range(q)])
    return offs


def _subpixel_patches(x, k, s, p, op):
    """Build per-phase im2col patches (s*s, K_ph, N*Ho2*Wo2) from the
    non-dilated input.  K_ph = (k//s)^2 * Cin; M order = (n, oh', ow')."""
    n, cin, h, w = x.shape
    lo = k - 1 - p
    assert lo >= 0, "padding > kernel_size - 1 not supported"
    ho = (h - 1) * s - 2 * p + k + op
    wo = (w - 1) * s - 2 * p + k + op
    # TODO(synk): general k % s != 0 / ragged-phase case not implemented;
    # typical upsampling deconv blocks (k=2s, p=s//2) satisfy these.
    assert k % s == 0 and ho % s == 0 and wo % s == 0, \
        "sub-pixel path requires k % s == 0 and output divisible by stride"
    q = k // s
    ho2, wo2 = ho // s, wo // s

    offs = _phase_offsets(k, s, p)
    e_min = min(e for per in offs for e, _ in per)
    e_max = max(e for per in offs for e, _ in per)
    pad_t = max(0, -e_min)
    pad_bh = max(0, ho2 - 1 + e_max - (h - 1))
    pad_bw = max(0, wo2 - 1 + e_max - (w - 1))
    xp = jnp.pad(x, ((0, 0), (0, 0), (pad_t, pad_bh), (pad_t, pad_bw)))

    m_ph = n * ho2 * wo2
    phase_patches = []
    for ph in range(s):
        for pw in range(s):
            taps = []
            for eh, _ in offs[ph]:
                for ew, _ in offs[pw]:
                    taps.append(xp[:, :, eh + pad_t:eh + pad_t + ho2,
                                   ew + pad_t:ew + pad_t + wo2])  # (N,Cin,Ho2,Wo2)
            pp = jnp.stack(taps, axis=0)                # (q*q, N, Cin, Ho2, Wo2)
            pp = jnp.transpose(pp, (0, 2, 1, 3, 4))     # (q*q, Cin, N, Ho2, Wo2)
            phase_patches.append(pp.reshape(q * q * cin, m_ph))
    patches = jnp.stack(phase_patches, axis=0)          # (s*s, K_ph, M_ph)
    return patches, ho, wo, ho2, wo2, offs


def _phase_weights(w_t, k, s, offs):
    """ConvTranspose2d weight (Cin, Cout, KH, KW) -> (s*s, Cout, K_ph),
    K rows ordered (tap_h, tap_w, ci) to match the patch layout."""
    cin, cout = w_t.shape[0], w_t.shape[1]
    q = k // s
    mats = []
    for ph in range(s):
        for pw in range(s):
            rows = []
            for _, kh in offs[ph]:
                for _, kw in offs[pw]:
                    rows.append(w_t[:, :, k - 1 - kh, k - 1 - kw])  # (Cin, Cout)
            m = jnp.stack(rows, axis=0).reshape(q * q * cin, cout)
            mats.append(jnp.transpose(m))                           # (Cout, K_ph)
    return jnp.stack(mats, axis=0)                                  # (s*s,Cout,K_ph)


def _pick_tile(m, max_tm=2048):
    """Largest lane-tile TM that is a multiple of 128, divides M evenly and is
    <= max_tm (keeps 2x double-buffered tiles far under v7x's 64 MiB VMEM)."""
    if m <= max_tm:
        return m
    for t in range(max_tm - (max_tm % 128), 127, -128):
        if m % t == 0:
            return t
    return m  # fallback: single block


# --------------------------------------------------------------------------
# Wrapper
# --------------------------------------------------------------------------
@functools.partial(jax.jit, static_argnames=("kernel_size", "stride", "padding",
                                             "output_padding", "apply_act"))
def deconv_block(x, w_t, bias, gamma, beta, *, kernel_size, stride, padding,
                 output_padding, apply_act=True):
    del bias  # per-channel constant bias is exactly cancelled by batch-stat BN
    n, cin, h, w = x.shape
    cout = w_t.shape[1]
    k, s, p, op = kernel_size, stride, padding, output_padding

    patches, ho, wo, ho2, wo2, offs = _subpixel_patches(x, k, s, p, op)
    wmats = _phase_weights(w_t, k, s, offs)              # (s*s, Cout, K_ph)
    # NOTE: on v6e/v7x, casting patches/wmats to bf16 here (keeping f32
    # accumulation + f32 BN math) halves patch HBM traffic; kept f32 for
    # bit-tight comparison against the f32 reference.
    ss, k_ph, m_ph = patches.shape
    tm = _pick_tile(m_ph)
    n_mt = m_ph // tm
    grid = (ss, n_mt)

    cparams = pltpu.CompilerParams(
        dimension_semantics=("parallel", "parallel"),
        vmem_limit_bytes=32 * 1024 * 1024)

    cost1 = pl.CostEstimate(
        flops=2 * ss * m_ph * k_ph * cout,
        transcendentals=0,
        bytes_accessed=4 * (ss * k_ph * m_ph + ss * cout * k_ph
                            + ss * cout * m_ph + 2 * ss * n_mt * cout))

    y, s1, s2 = pl.pallas_call(
        _deconv_stats_kernel,
        grid=grid,
        in_specs=[
            pl.BlockSpec((1, k_ph, tm), lambda i, j: (i, 0, j)),     # patches
            pl.BlockSpec((1, cout, k_ph), lambda i, j: (i, 0, 0)),   # weights
        ],
        out_specs=(
            pl.BlockSpec((1, cout, tm), lambda i, j: (i, 0, j)),     # y
            pl.BlockSpec((1, 1, cout, 1), lambda i, j: (i, j, 0, 0)),  # sum
            pl.BlockSpec((1, 1, cout, 1), lambda i, j: (i, j, 0, 0)),  # sumsq
        ),
        out_shape=(
            jax.ShapeDtypeStruct((ss, cout, m_ph), jnp.float32),
            jax.ShapeDtypeStruct((ss, n_mt, cout, 1), jnp.float32),
            jax.ShapeDtypeStruct((ss, n_mt, cout, 1), jnp.float32),
        ),
        compiler_params=cparams,
        cost_estimate=cost1,
    )(patches, wmats)

    # Fold batch statistics + BN affine into a single per-channel FMA.
    count = float(ss * m_ph)                              # == N * Ho * Wo
    mean = jnp.sum(s1, axis=(0, 1, 3)) / count            # (Cout,)
    var = jnp.maximum(jnp.sum(s2, axis=(0, 1, 3)) / count - mean * mean, 0.0)
    scale = gamma * jax.lax.rsqrt(var + BN_EPS)
    shift = beta - mean * scale

    cost2 = pl.CostEstimate(flops=2 * ss * m_ph * cout, transcendentals=0,
                            bytes_accessed=8 * ss * cout * m_ph)
    out_ph = pl.pallas_call(
        functools.partial(_bn_act_kernel, apply_act=apply_act),
        grid=grid,
        in_specs=[
            pl.BlockSpec((1, cout, tm), lambda i, j: (i, 0, j)),
            pl.BlockSpec((cout, 1), lambda i, j: (0, 0)),
            pl.BlockSpec((cout, 1), lambda i, j: (0, 0)),
        ],
        out_specs=pl.BlockSpec((1, cout, tm), lambda i, j: (i, 0, j)),
        out_shape=jax.ShapeDtypeStruct((ss, cout, m_ph), jnp.float32),
        input_output_aliases={0: 0},        # reuse y's HBM buffer in-place (P8)
        compiler_params=cparams,
        cost_estimate=cost2,
    )(y, scale.reshape(cout, 1), shift.reshape(cout, 1))

    # Pixel-shuffle the phase axis back into NCHW spatial positions.
    out6 = out_ph.reshape(s, s, cout, n, ho2, wo2)        # (ph, pw, co, n, oh', ow')
    out = jnp.transpose(out6, (3, 2, 4, 0, 5, 1)).reshape(n, cout, ho, wo)
    return out


# --------------------------------------------------------------------------
# Pure-JAX reference (independent path: lax dilated conv + BN + ReLU)
# --------------------------------------------------------------------------
def _reference(x, w_t, bias, gamma, beta, k, stride, padding, output_padding,
               apply_act=True):
    w_flip = jnp.transpose(w_t[:, :, ::-1, ::-1], (2, 3, 0, 1))   # HWIO
    lo = k - 1 - padding
    hi = k - 1 - padding + output_padding
    dn = jax.lax.conv_dimension_numbers(x.shape, w_flip.shape,
                                        ("NCHW", "HWIO", "NCHW"))
    y = jax.lax.conv_general_dilated(
        x, w_flip, window_strides=(1, 1),
        padding=((lo, hi), (lo, hi)), lhs_dilation=(stride, stride),
        dimension_numbers=dn)
    y = y + bias[None, :, None, None]
    mean = jnp.mean(y, axis=(0, 2, 3), keepdims=True)
    var = jnp.mean((y - mean) ** 2, axis=(0, 2, 3), keepdims=True)
    y = (y - mean) * jax.lax.rsqrt(var + BN_EPS)
    y = y * gamma[None, :, None, None] + beta[None, :, None, None]
    return jnp.maximum(y, 0.0) if apply_act else y


if __name__ == "__main__":
    # DeconvBlock(in=4, out=8, kernel=4, stride=2, pad=1, out_pad=0)
    IN_C, OUT_C, K, S, P, OP = 4, 8, 4, 2, 1, 0
    N, H, W = 2, 16, 16                      # -> output (2, 8, 32, 32)

    key = jax.random.PRNGKey(0)
    kx, kw, kb, kg, kbt = jax.random.split(key, 5)
    x = jax.random.normal(kx, (N, IN_C, H, W), dtype=jnp.float32)
    # ConvTranspose2d weight layout: (in_channels, out_channels, KH, KW)
    w_t = jax.random.normal(kw, (IN_C, OUT_C, K, K), dtype=jnp.float32) * 0.1
    bias = jax.random.normal(kb, (OUT_C,), dtype=jnp.float32) * 0.1
    gamma = 1.0 + 0.1 * jax.random.normal(kg, (OUT_C,), dtype=jnp.float32)
    beta = 0.1 * jax.random.normal(kbt, (OUT_C,), dtype=jnp.float32)

    out = deconv_block(x, w_t, bias, gamma, beta, kernel_size=K, stride=S,
                       padding=P, output_padding=OP, apply_act=True)
    out = jax.block_until_ready(out)

    ref = _reference(x, w_t, bias, gamma, beta, K, S, P, OP, apply_act=True)
    ho = (H - 1) * S - 2 * P + K + OP
    wo = (W - 1) * S - 2 * P + K + OP
    assert out.shape == (N, OUT_C, ho, wo), out.shape
    assert jnp.allclose(out, ref, atol=2e-4, rtol=2e-4), "mismatch vs reference"
    print("KERNEL_OK")
</pallas_src>

<mosaic_0001>
module attributes {stable_mosaic.version = 11 : i64} {
  func.func @_deconv_stats_kernel(%arg0: i32, %arg1: i32, %arg2: memref<1x16x512xf32, #tpu.memory_space<vmem>>, %arg3: memref<1x8x16xf32, #tpu.memory_space<vmem>>, %arg4: memref<1x8x512xf32, #tpu.memory_space<vmem>>, %arg5: memref<1x1x8x1xf32, #tpu.memory_space<vmem>>, %arg6: memref<1x1x8x1xf32, #tpu.memory_space<vmem>>) attributes {dimension_semantics = [#tpu.dimension_semantics<parallel>, #tpu.dimension_semantics<parallel>], iteration_bounds = array<i64: 4, 1>, scalar_prefetch = 0 : i64, scratch_operands = 0 : i64, tpu.core_type = #tpu.core_type<tc>, window_params = [{transform_indices = @transform_0, window_bounds = array<i64: 1, 16, 512>}, {transform_indices = @transform_1, window_bounds = array<i64: 1, 8, 16>}, {transform_indices = @transform_2, window_bounds = array<i64: 1, 8, 512>}, {transform_indices = @transform_3, window_bounds = array<i64: 1, 1, 8, 1>}, {transform_indices = @transform_4, window_bounds = array<i64: 1, 1, 8, 1>}]} {
    %c0 = arith.constant 0 : index
    %c0_0 = arith.constant 0 : index
    %c0_1 = arith.constant 0 : index
    %0 = vector.load %arg3[%c0, %c0_0, %c0_1] : memref<1x8x16xf32, #tpu.memory_space<vmem>>, vector<1x8x16xf32>
    %1 = vector.shape_cast %0 : vector<1x8x16xf32> to vector<8x16xf32>
    %c0_2 = arith.constant 0 : index
    %c0_3 = arith.constant 0 : index
    %c0_4 = arith.constant 0 : index
    %2 = vector.load %arg2[%c0_2, %c0_3, %c0_4] : memref<1x16x512xf32, #tpu.memory_space<vmem>>, vector<1x16x512xf32>
    %3 = vector.shape_cast %2 : vector<1x16x512xf32> to vector<16x512xf32>
    %cst = arith.constant dense<0.000000e+00> : vector<8x512xf32>
    %4 = tpu.matmul %1, %3, %cst {dimension_numbers = #tpu.dot_dimension_numbers<[1], [0], [0], [1], [0, 0, 1, 1], [], []>} : vector<8x16xf32>, vector<16x512xf32>, vector<8x512xf32> -> vector<8x512xf32>
    %c0_5 = arith.constant 0 : index
    %c0_6 = arith.constant 0 : index
    %c0_7 = arith.constant 0 : index
    %5 = vector.load %arg4[%c0_5, %c0_6, %c0_7] : memref<1x8x512xf32, #tpu.memory_space<vmem>>, vector<1x8x512xf32>
    %6 = vector.shape_cast %5 : vector<1x8x512xf32> to vector<8x512xf32>
    %7 = vector.shape_cast %4 : vector<8x512xf32> to vector<1x8x512xf32>
    tpu.vector_store %arg4[%c0_5, %c0_6, %c0_7], %7 {strides = array<i32>} : memref<1x8x512xf32, #tpu.memory_space<vmem>>, vector<1x8x512xf32>,
    %cst_8 = arith.constant dense<0.000000e+00> : vector<8xf32>
    %8 = vector.multi_reduction <add>, %4, %cst_8 [1] : vector<8x512xf32> to vector<8xf32>
    %9 = vector.shape_cast %8 : vector<8xf32> to vector<8x1xf32>
    %c0_9 = arith.constant 0 : index
    %c0_10 = arith.constant 0 : index
    %c0_11 = arith.constant 0 : index
    %c0_12 = arith.constant 0 : index
    %10 = vector.load %arg5[%c0_9, %c0_10, %c0_11, %c0_12] : memref<1x1x8x1xf32, #tpu.memory_space<vmem>>, vector<1x1x8x1xf32>
    %11 = vector.shape_cast %10 : vector<1x1x8x1xf32> to vector<8x1xf32>
    %12 = vector.shape_cast %9 : vector<8x1xf32> to vector<1x1x8x1xf32>
    tpu.vector_store %arg5[%c0_9, %c0_10, %c0_11, %c0_12], %12 {strides = array<i32>} : memref<1x1x8x1xf32, #tpu.memory_space<vmem>>, vector<1x1x8x1xf32>,
    %13 = arith.mulf %4, %4 : vector<8x512xf32>
    %cst_13 = arith.constant dense<0.000000e+00> : vector<8xf32>
    %14 = vector.multi_reduction <add>, %13, %cst_13 [1] : vector<8x512xf32> to vector<8xf32>
    %15 = vector.shape_cast %14 : vector<8xf32> to vector<8x1xf32>
    %c0_14 = arith.constant 0 : index
    %c0_15 = arith.constant 0 : index
    %c0_16 = arith.constant 0 : index
    %c0_17 = arith.constant 0 : index
    %16 = vector.load %arg6[%c0_14, %c0_15, %c0_16, %c0_17] : memref<1x1x8x1xf32, #tpu.memory_space<vmem>>, vector<1x1x8x1xf32>
    %17 = vector.shape_cast %16 : vector<1x1x8x1xf32> to vector<8x1xf32>
    %18 = vector.shape_cast %15 : vector<8x1xf32> to vector<1x1x8x1xf32>
    tpu.vector_store %arg6[%c0_14, %c0_15, %c0_16, %c0_17], %18 {strides = array<i32>} : memref<1x1x8x1xf32, #tpu.memory_space<vmem>>, vector<1x1x8x1xf32>,
    return
  }
  func.func @transform_0(%arg0: i32, %arg1: i32) -> (i32, i32, i32) {
    %c0_i32 = arith.constant 0 : i32
    %c0_i32_0 = arith.constant 0 : i32
    return %arg0, %c0_i32, %arg1 : i32, i32, i32
  }
  func.func @transform_1(%arg0: i32, %arg1: i32) -> (i32, i32, i32) {
    %c0_i32 = arith.constant 0 : i32
    %c0_i32_0 = arith.constant 0 : i32
    %c0_i32_1 = arith.constant 0 : i32
    return %arg0, %c0_i32, %c0_i32_0 : i32, i32, i32
  }
  func.func @transform_2(%arg0: i32, %arg1: i32) -> (i32, i32, i32) {
    %c0_i32 = arith.constant 0 : i32
    %c0_i32_0 = arith.constant 0 : i32
    return %arg0, %c0_i32, %arg1 : i32, i32, i32
  }
  func.func @transform_3(%arg0: i32, %arg1: i32) -> (i32, i32, i32, i32) {
    %c0_i32 = arith.constant 0 : i32
    %c0_i32_0 = arith.constant 0 : i32
    %c0_i32_1 = arith.constant 0 : i32
    return %arg0, %arg1, %c0_i32, %c0_i32_0 : i32, i32, i32, i32
  }
  func.func @transform_4(%arg0: i32, %arg1: i32) -> (i32, i32, i32, i32) {
    %c0_i32 = arith.constant 0 : i32
    %c0_i32_0 = arith.constant 0 : i32
    %c0_i32_1 = arith.constant 0 : i32
    return %arg0, %arg1, %c0_i32, %c0_i32_0 : i32, i32, i32, i32
  }
}

module attributes {stable_mosaic.version = 11 : i64} {
  func.func @_bn_act_kernel(%arg0: i32, %arg1: i32, %arg2: memref<1x8x512xf32, #tpu.memory_space<vmem>>, %arg3: memref<8x1xf32, #tpu.memory_space<vmem>>, %arg4: memref<8x1xf32, #tpu.memory_space<vmem>>, %arg5: memref<1x8x512xf32, #tpu.memory_space<vmem>>) attributes {dimension_semantics = [#tpu.dimension_semantics<parallel>, #tpu.dimension_semantics<parallel>], iteration_bounds = array<i64: 4, 1>, scalar_prefetch = 0 : i64, scratch_operands = 0 : i64, tpu.core_type = #tpu.core_type<tc>, window_params = [{transform_indices = @transform_0, window_bounds = array<i64: 1, 8, 512>}, {pipeline_mode = #tpu.pipeline_mode<synchronous>, transform_indices = @transform_1, window_bounds = array<i64: 8, 1>}, {pipeline_mode = #tpu.pipeline_mode<synchronous>, transform_indices = @transform_2, window_bounds = array<i64: 8, 1>}, {transform_indices = @transform_3, window_bounds = array<i64: 1, 8, 512>}]} {
    %c0 = arith.constant 0 : index
    %c0_0 = arith.constant 0 : index
    %c0_1 = arith.constant 0 : index
    %0 = vector.load %arg2[%c0, %c0_0, %c0_1] : memref<1x8x512xf32, #tpu.memory_space<vmem>>, vector<1x8x512xf32>
    %1 = vector.shape_cast %0 : vector<1x8x512xf32> to vector<8x512xf32>
    %c0_2 = arith.constant 0 : index
    %c0_3 = arith.constant 0 : index
    %2 = vector.load %arg3[%c0_2, %c0_3] : memref<8x1xf32, #tpu.memory_space<vmem>>, vector<8x1xf32>
    %3 = vector.broadcast %2 : vector<8x1xf32> to vector<8x512xf32>
    %4 = arith.mulf %1, %3 : vector<8x512xf32>
    %c0_4 = arith.constant 0 : index
    %c0_5 = arith.constant 0 : index
    %5 = vector.load %arg4[%c0_4, %c0_5] : memref<8x1xf32, #tpu.memory_space<vmem>>, vector<8x1xf32>
    %6 = vector.broadcast %5 : vector<8x1xf32> to vector<8x512xf32>
    %7 = arith.addf %4, %6 : vector<8x512xf32>
    %cst = arith.constant 0.000000e+00 : f32
    %8 = vector.broadcast %cst : f32 to vector<8x512xf32>
    %9 = arith.maximumf %7, %8 : vector<8x512xf32>
    %c0_6 = arith.constant 0 : index
    %c0_7 = arith.constant 0 : index
    %c0_8 = arith.constant 0 : index
    %10 = vector.load %arg5[%c0_6, %c0_7, %c0_8] : memref<1x8x512xf32, #tpu.memory_space<vmem>>, vector<1x8x512xf32>
    %11 = vector.shape_cast %10 : vector<1x8x512xf32> to vector<8x512xf32>
    %12 = vector.shape_cast %9 : vector<8x512xf32> to vector<1x8x512xf32>
    tpu.vector_store %arg5[%c0_6, %c0_7, %c0_8], %12 {strides = array<i32>} : memref<1x8x512xf32, #tpu.memory_space<vmem>>, vector<1x8x512xf32>,
    return
  }
  func.func @transform_0(%arg0: i32, %arg1: i32) -> (i32, i32, i32) {
    %c0_i32 = arith.constant 0 : i32
    %c0_i32_0 = arith.constant 0 : i32
    return %arg0, %c0_i32, %arg1 : i32, i32, i32
  }
  func.func @transform_1(%arg0: i32, %arg1: i32) -> (i32, i32) {
    %c0_i32 = arith.constant 0 : i32
    %c0_i32_0 = arith.constant 0 : i32
    %c0_i32_1 = arith.constant 0 : i32
    return %c0_i32, %c0_i32_0 : i32, i32
  }
  func.func @transform_2(%arg0: i32, %arg1: i32) -> (i32, i32) {
    %c0_i32 = arith.constant 0 : i32
    %c0_i32_0 = arith.constant 0 : i32
    %c0_i32_1 = arith.constant 0 : i32
    return %c0_i32, %c0_i32_0 : i32, i32
  }
  func.func @transform_3(%arg0: i32, %arg1: i32) -> (i32, i32, i32) {
    %c0_i32 = arith.constant 0 : i32
    %c0_i32_0 = arith.constant 0 : i32
    return %arg0, %c0_i32, %arg1 : i32, i32, i32
  }
}

</mosaic_0001>

<llo_original>
// kernel: deconv_block.3
$region0: #{deconv_block.3}
  #allocation0 [shape = 'u32[]', space=smem, size = 0x4, offset = 0x4, fixed_abs, tag = 'smem constant byte address 0x4 - core index']
  #allocation1 [shape = 'u32[72,128]{1,0:T(1,128)}', space=vmem, size = 0x9000, scoped, tag = 'internal scratch']
  %s0 = inlined_call_operand.vmem [shape: f32[4,8,512], index: 0, kind: input, shape index: {}, may-alias: {0,3}]
  %s1 = inlined_call_operand.vmem [shape: f32[8,1], index: 1, kind: input, shape index: {}]
  %s2 = inlined_call_operand.vmem [shape: f32[8,1], index: 2, kind: input, shape index: {}]
  %s3 = inlined_call_operand.vmem [shape: f32[4,8,512], index: 3, kind: output, shape index: {}, may-alias: {0,3}]
  %s4 = sld [smem:[#allocation0]]
  $region45: #{deconv_block.3} parent=0
    _
  %s6 = ssub.s32 1, %s4
  %s7 = scalar_select 0, %s6, %s4
  loop: start=0, step=1, limit=6
  $region2: #{deconv_block.3} parent=0 // loop_pre_header
    _
  $region3: #{deconv_block.3} parent=0 // loop_header
    %s9 = sphi 0, %s13
    %p10 = scmp.ge.s32.totalorder %s9, 6
    %s16 = sphi 0, %s28
    %s17 = sphi 0, %s24
    %s18 = sphi 0, %s16
    %s19 = sphi 0, %s17
    %s20 = sphi 0, %s18
    %s21 = sphi 0, %s19
    %s33 = sphi 0, %s35
    %s36 = sphi 0, %s33
    %s37 = sphi 0, %s36
    %s53 = sphi 0, %s37
    %s57 = sphi 0, %s57
    %s59 = sphi 0, %s57
    %s60 = sphi 0, %s59
    %s74 = sphi 0, %s60
    %s78 = sphi 0, %s78
    %s80 = sphi 0, %s78
    %s81 = sphi 0, %s80
    %s95 = sphi 0, %s81
    %s103 = sphi 0, %s105
    %s106 = sphi 0, %s103
    %s107 = sphi 0, %s106
    %s123 = sphi 0, %s107
  $region4: #{deconv_block.3} parent=0 // loop_header_branch
    %12 = sbr.rel (%p10) target = $region8
  $region5: #{deconv_block.3} parent=0 // loop_body
    %s14 = ssub.s32 %s9, 1
    %s15 = ssub.s32 %s9, 2
    %s22 = sadd.s32 1, %s17
    %p23 = scmp.ge.s32.totalorder %s22, 1
    %s24 = scalar_select %p23, 0, %s22
    %s25 = sadd.s32 1, %s16
    %s26 = scalar_select %p23, %s25, %s16
    %p27 = scmp.ge.s32.totalorder %s26, 4
    %s28 = scalar_select %p27, 0, %s26
    %s29 = ssub.s32 %s16, %s28
    %s30 = ssub.s32 %s17, %s24
    %s31 = sor.u32 %s29, %s30
    %p32 = scmp.eq.s32.totalorder %s31, 0
    %s34 = sadd.s32 %s33, 1
    %s35 = scalar_select %p32, %s33, %s34
    %p38 = pneg %p32
    %p39 = scmp.eq.s32.totalorder %s9, 3
    %p40 = por %p38, %p39
    %p41 = scmp.ne.s32.totalorder %s33, %s36
    %p42 = scmp.eq.s32.totalorder %s9, 0
    %p43 = por %p41, %p42
    %p44 = scmp.ne.s32.totalorder %s33, %s36
    %p45 = scmp.eq.s32.totalorder %s14, 3
    %p46 = por %p44, %p45
    %p47 = scmp.ne.s32.totalorder %s36, %s37
    %p48 = scmp.eq.s32.totalorder %s14, 0
    %p49 = por %p47, %p48
    %p50 = scmp.ne.s32.totalorder %s36, %s37
    %p51 = scmp.eq.s32.totalorder %s15, 3
    %p52 = por %p50, %p51
    %p54 = scmp.ne.s32.totalorder %s37, %s53
    %p55 = scmp.eq.s32.totalorder %s15, 0
    %p56 = por %p54, %p55
    %s58 = sadd.s32 %s57, 1
    %p61 = scmp.eq.s32.totalorder %s9, 3
    %p62 = scmp.ne.s32.totalorder %s57, %s59
    %p63 = scmp.eq.s32.totalorder %s9, 0
    %p64 = por %p62, %p63
    %p65 = scmp.ne.s32.totalorder %s57, %s59
    %p66 = scmp.eq.s32.totalorder %s14, 3
    %p67 = por %p65, %p66
    %p68 = scmp.ne.s32.totalorder %s59, %s60
    %p69 = scmp.eq.s32.totalorder %s14, 0
    %p70 = por %p68, %p69
    %p71 = scmp.ne.s32.totalorder %s59, %s60
    %p72 = scmp.eq.s32.totalorder %s15, 3
    %p73 = por %p71, %p72
    %p75 = scmp.ne.s32.totalorder %s60, %s74
    %p76 = scmp.eq.s32.totalorder %s15, 0
    %p77 = por %p75, %p76
    %s79 = sadd.s32 %s78, 1
    %p82 = scmp.eq.s32.totalorder %s9, 3
    %p83 = scmp.ne.s32.totalorder %s78, %s80
    %p84 = scmp.eq.s32.totalorder %s9, 0
    %p85 = por %p83, %p84
    %p86 = scmp.ne.s32.totalorder %s78, %s80
    %p87 = scmp.eq.s32.totalorder %s14, 3
    %p88 = por %p86, %p87
    %p89 = scmp.ne.s32.totalorder %s80, %s81
    %p90 = scmp.eq.s32.totalorder %s14, 0
    %p91 = por %p89, %p90
    %p92 = scmp.ne.s32.totalorder %s80, %s81
    %p93 = scmp.eq.s32.totalorder %s15, 3
    %p94 = por %p92, %p93
    %p96 = scmp.ne.s32.totalorder %s81, %s95
    %p97 = scmp.eq.s32.totalorder %s15, 0
    %p98 = por %p96, %p97
    %s99 = ssub.s32 %s16, %s28
    %s100 = ssub.s32 %s17, %s24
    %s101 = sor.u32 %s99, %s100
    %p102 = scmp.eq.s32.totalorder %s101, 0
    %s104 = sadd.s32 %s103, 1
    %s105 = scalar_select %p102, %s103, %s104
    %p108 = pneg %p102
    %p109 = scmp.eq.s32.totalorder %s9, 3
    %p110 = por %p108, %p109
    %p111 = scmp.ne.s32.totalorder %s103, %s106
    %p112 = scmp.eq.s32.totalorder %s9, 0
    %p113 = por %p111, %p112
    %p114 = scmp.ne.s32.totalorder %s103, %s106
    %p115 = scmp.eq.s32.totalorder %s14, 3
    %p116 = por %p114, %p115
    %p117 = scmp.ne.s32.totalorder %s106, %s107
    %p118 = scmp.eq.s32.totalorder %s14, 0
    %p119 = por %p117, %p118
    %p120 = scmp.ne.s32.totalorder %s106, %s107
    %p121 = scmp.eq.s32.totalorder %s15, 3
    %p122 = por %p120, %p121
    %p124 = scmp.ne.s32.totalorder %s107, %s123
    %p125 = scmp.eq.s32.totalorder %s15, 0
    %p126 = por %p124, %p125
    %p127 = scmp.le.s32.totalorder 1, %s9
    %p128 = scmp.lt.s32.totalorder %s9, 5
    %p129 = pnand %p127, %p128
    %p130 = pneg %p129
    // Predicated region
    $region9: #{deconv_block.3} parent=5 // pred_check
      _
    $region10: #{deconv_block.3} parent=5 // pred_check_branch
      %132 = sbr.rel (%p129) target = $region12
    $region11: #{deconv_block.3} parent=5 // pred_region
      %s133 = ssub.s32 %s9, 1
      // Predicated region
      $region13: #{deconv_block.3} parent=11 // pred_check
        %p134 = pneg %p70
      $region14: #{deconv_block.3} parent=11 // pred_check_branch
        %136 = sbr.rel (%p134) target = $region16
      $region15: #{deconv_block.3} parent=11 // pred_region
        _
      $region16: #{deconv_block.3} parent=11 // pred_fallthru
        _
      // Predicated region
      $region17: #{deconv_block.3} parent=11 // pred_check
        %p137 = pneg %p91
      $region18: #{deconv_block.3} parent=11 // pred_check_branch
        %139 = sbr.rel (%p137) target = $region20
      $region19: #{deconv_block.3} parent=11 // pred_region
        _
      $region20: #{deconv_block.3} parent=11 // pred_fallthru
        _
    $region12: #{deconv_block.3} parent=5 // pred_fallthru
      _
    %p140 = scmp.lt.s32.totalorder %s9, 4
    // Predicated region
    $region21: #{deconv_block.3} parent=5 // pred_check
      %p141 = pneg %p140
    $region22: #{deconv_block.3} parent=5 // pred_check_branch
      %143 = sbr.rel (%p141) target = $region24
    $region23: #{deconv_block.3} parent=5 // pred_region
      // Predicated region
      $region25: #{deconv_block.3} parent=23 // pred_check
        %p144 = pneg %p43
      $region26: #{deconv_block.3} parent=23 // pred_check_branch
        %146 = sbr.rel (%p144) target = $region28
      $region27: #{deconv_block.3} parent=23 // pred_region
        %s147 = smul.u32 4, %s17
        %p148 = scmp.lt.s32.totalorder %s16, 3
        %s149 = scalar_select %p148, %s16, 3
        %p150 = scmp.lt.s32.totalorder %s147, 3
        %s151 = scalar_select %p150, %s147, 3
        %s152 = smul.addr %s149, 4
        %s153 = sadd.s32 %s151, %s152
        %s154 = smul.addr %s153, 8
        %s155 = scalar_lea.vmem %s0, %s154
        %s156 = smul.u32 4, %s17
      $region28: #{deconv_block.3} parent=23 // pred_fallthru
        _
    $region24: #{deconv_block.3} parent=5 // pred_fallthru
      _
    %p157 = scmp.le.s32.totalorder 1, %s9
    %p158 = scmp.lt.s32.totalorder %s9, 5
    %p159 = pnand %p157, %p158
    %p160 = pneg %p159
    // Predicated region
    $region29: #{deconv_block.3} parent=5 // pred_check
      _
    $region30: #{deconv_block.3} parent=5 // pred_check_branch
      %162 = sbr.rel (%p159) target = $region32
    $region31: #{deconv_block.3} parent=5 // pred_region
      %s163 = ssub.s32 %s9, 1
      %s164 = smul.u32 4, %s19
      %p165 = scmp.lt.s32.totalorder %s18, 3
      %s166 = scalar_select %p165, %s18, 3
      %p167 = scmp.lt.s32.totalorder %s164, 3
      %s168 = scalar_select %p167, %s164, 3
      %s169 = smul.addr %s166, 4
      %s170 = sadd.s32 %s168, %s169
      %s171 = smul.addr %s170, 8
      %s172 = scalar_lea.vmem %s0, %s171
      %p173 = pneg %p49
      %p174 = pneg %p46
      %p175 = pneg %p70
      %p176 = pneg %p67
      %p177 = pneg %p91
      %p178 = pneg %p88
      %p179 = pneg %p119
      %p180 = pneg %p116
      %s181 = smul.u32 4, %s19
      %p182 = scmp.lt.s32.totalorder %s18, 3
      %s183 = scalar_select %p182, %s18, 3
      %p184 = scmp.lt.s32.totalorder %s181, 3
      %s185 = scalar_select %p184, %s181, 3
      %s186 = smul.addr %s183, 4
      %s187 = sadd.s32 %s185, %s186
      %s188 = smul.addr %s187, 8
      %s189 = scalar_lea.vmem %s3, %s188
      %s190 = smul.u32 4, %s19
      %p191 = scmp.lt.s32.totalorder %s18, 3
      %s192 = scalar_select %p191, %s18, 3
      %p193 = scmp.lt.s32.totalorder %s190, 3
      %s194 = scalar_select %p193, %s190, 3
      %s195 = smul.addr %s192, 4
      %s196 = sadd.s32 %s194, %s195
      %s197 = smul.addr %s196, 8
      %s198 = scalar_lea.vmem %s0, %s197
      %s199 = smul.u32 4, %s19
      %s200 = smul.u32 4, %s19
      %p201 = scmp.lt.s32.totalorder %s18, 3
      %s202 = scalar_select %p201, %s18, 3
      %p203 = scmp.lt.s32.totalorder %s200, 3
      %s204 = scalar_select %p203, %s200, 3
      %s205 = smul.addr %s202, 4
      %s206 = sadd.s32 %s204, %s205
      %s207 = smul.addr %s206, 8
      %s208 = scalar_lea.vmem %s3, %s207
      %s209 = smul.u32 4, %s19
      %v210 = vld [vmem:[%s198] sm:$0xff]
      %v211 = vld [vmem:[%s198 + $0x8] sm:$0xff]
      %v212 = vld [vmem:[%s198 + $0x10] sm:$0xff]
      %v213 = vld [vmem:[%s198 + $0x18] sm:$0xff]
      %v214 = vld [vmem:[%s1] sm:$0xff]
      %216 = vset.pattern.permute.xlu0 0
      %217 = vperm.xlu0 %216, %v214
      %v218 = vpop.permute.xlu0 %217
      %v220 = vmul.f32 %v210, %v218
      %v221 = vmul.f32 %v211, %v218
      %v222 = vmul.f32 %v212, %v218
      %v223 = vmul.f32 %v213, %v218
      %v224 = vld [vmem:[%s2] sm:$0xff]
      %226 = vset.pattern.permute.xlu0 0
      %227 = vperm.xlu0 %226, %v224
      %v228 = vpop.permute.xlu0 %227
      %v230 = vadd.f32 %v220, %v228
      %v231 = vadd.f32 %v221, %v228
      %v232 = vadd.f32 %v222, %v228
      %v233 = vadd.f32 %v223, %v228
      %v234 = vmax.f32 %v230, 0.0
      %v235 = vmax.f32 %v231, 0.0
      %v236 = vmax.f32 %v232, 0.0
      %v237 = vmax.f32 %v233, 0.0
      %238 = vst [vmem:[%s208] sm:$0xff] %v234
      %239 = vst [vmem:[%s208 + $0x8] sm:$0xff] %v235
      %240 = vst [vmem:[%s208 + $0x10] sm:$0xff] %v236
      %241 = vst [vmem:[%s208 + $0x18] sm:$0xff] %v237
      %s242 = smul.u32 4, %s19
      %p243 = scmp.lt.s32.totalorder %s18, 3
      %s244 = scalar_select %p243, %s18, 3
      %p245 = scmp.lt.s32.totalorder %s242, 3
      %s246 = scalar_select %p245, %s242, 3
      %s247 = smul.addr %s244, 4
      %s248 = sadd.s32 %s246, %s247
      %s249 = smul.addr %s248, 8
      %s250 = scalar_lea.vmem %s3, %s249
      // Predicated region
      $region33: #{deconv_block.3} parent=31 // pred_check
        %p251 = pneg %p116
      $region34: #{deconv_block.3} parent=31 // pred_check_branch
        %253 = sbr.rel (%p251) target = $region36
      $region35: #{deconv_block.3} parent=31 // pred_region
        %s254 = smul.u32 4, %s19
      $region36: #{deconv_block.3} parent=31 // pred_fallthru
        _
    $region32: #{deconv_block.3} parent=5 // pred_fallthru
      _
    %p255 = scmp.le.s32.totalorder 2, %s9
    // Predicated region
    $region37: #{deconv_block.3} parent=5 // pred_check
      %p256 = pneg %p255
    $region38: #{deconv_block.3} parent=5 // pred_check_branch
      %258 = sbr.rel (%p256) target = $region40
    $region39: #{deconv_block.3} parent=5 // pred_region
      %s259 = ssub.s32 %s9, 2
      // Predicated region
      $region41: #{deconv_block.3} parent=39 // pred_check
        %p260 = pneg %p122
      $region42: #{deconv_block.3} parent=39 // pred_check_branch
        %262 = sbr.rel (%p260) target = $region44
      $region43: #{deconv_block.3} parent=39 // pred_region
        %s263 = smul.u32 4, %s21
        %p264 = scmp.lt.s32.totalorder %s20, 3
        %s265 = scalar_select %p264, %s20, 3
        %p266 = scmp.lt.s32.totalorder %s263, 3
        %s267 = scalar_select %p266, %s263, 3
        %s268 = smul.addr %s265, 4
        %s269 = sadd.s32 %s267, %s268
        %s270 = smul.addr %s269, 8
        %s271 = scalar_lea.vmem %s3, %s270
      $region44: #{deconv_block.3} parent=39 // pred_fallthru
        _
    $region40: #{deconv_block.3} parent=5 // pred_fallthru
      _
  $region6: #{deconv_block.3} parent=0 // loop_footer
    %s13 = sadd.s32 1, %s9
  $region7: #{deconv_block.3} parent=0 // loop_footer_branch
    %8 = sbr.rel target = $region3
  $region8: #{deconv_block.3} parent=0 // loop_exit
    _

// kernel: deconv_block.2
$region0: #{deconv_block.2}
  #allocation0 [shape = 'u32[]', space=smem, size = 0x4, offset = 0x4, fixed_abs, tag = 'smem constant byte address 0x4 - core index']
  #allocation1 [shape = 'u32[72,128]{1,0:T(1,128)}', space=vmem, size = 0x9000, scoped, tag = 'internal scratch']
  %s0 = inlined_call_operand.vmem [shape: f32[4,16,512], index: 0, kind: input, shape index: {}]
  %s1 = inlined_call_operand.vmem [shape: f32[4,8,16], index: 1, kind: input, shape index: {}]
  %s2 = inlined_call_operand.vmem [shape: f32[4,8,512], index: 2, kind: output, shape index: {0}]
  %s3 = inlined_call_operand.vmem [shape: f32[4,1,8,1], index: 3, kind: output, shape index: {1}]
  %s4 = inlined_call_operand.vmem [shape: f32[4,1,8,1], index: 4, kind: output, shape index: {2}]
  %5 = xla_tuple %s2, %s3, %s4
  %s6 = sld [smem:[#allocation0]]
  $region57: #{deconv_block.2} parent=0
    _
  %s8 = ssub.s32 1, %s6
  %s9 = scalar_select 0, %s8, %s6
  loop: start=0, step=1, limit=6
  $region2: #{deconv_block.2} parent=0 // loop_pre_header
    _
  $region3: #{deconv_block.2} parent=0 // loop_header
    %s11 = sphi 0, %s15
    %p12 = scmp.ge.s32.totalorder %s11, 6
    %s18 = sphi 0, %s30
    %s19 = sphi 0, %s26
    %s20 = sphi 0, %s18
    %s21 = sphi 0, %s19
    %s22 = sphi 0, %s20
    %s23 = sphi 0, %s21
    %s35 = sphi 0, %s37
    %s38 = sphi 0, %s35
    %s39 = sphi 0, %s38
    %s55 = sphi 0, %s39
    %s61 = sphi 0, %s63
    %s64 = sphi 0, %s61
    %s65 = sphi 0, %s64
    %s81 = sphi 0, %s65
    %s89 = sphi 0, %s91
    %s92 = sphi 0, %s89
    %s93 = sphi 0, %s92
    %s109 = sphi 0, %s93
    %s117 = sphi 0, %s119
    %s120 = sphi 0, %s117
    %s121 = sphi 0, %s120
    %s137 = sphi 0, %s121
    %s145 = sphi 0, %s147
    %s148 = sphi 0, %s145
    %s149 = sphi 0, %s148
    %s165 = sphi 0, %s149
  $region4: #{deconv_block.2} parent=0 // loop_header_branch
    %14 = sbr.rel (%p12) target = $region8
  $region5: #{deconv_block.2} parent=0 // loop_body
    %s16 = ssub.s32 %s11, 1
    %s17 = ssub.s32 %s11, 2
    %s24 = sadd.s32 1, %s19
    %p25 = scmp.ge.s32.totalorder %s24, 1
    %s26 = scalar_select %p25, 0, %s24
    %s27 = sadd.s32 1, %s18
    %s28 = scalar_select %p25, %s27, %s18
    %p29 = scmp.ge.s32.totalorder %s28, 4
    %s30 = scalar_select %p29, 0, %s28
    %s31 = ssub.s32 %s18, %s30
    %s32 = ssub.s32 %s19, %s26
    %s33 = sor.u32 %s31, %s32
    %p34 = scmp.eq.s32.totalorder %s33, 0
    %s36 = sadd.s32 %s35, 1
    %s37 = scalar_select %p34, %s35, %s36
    %p40 = pneg %p34
    %p41 = scmp.eq.s32.totalorder %s11, 3
    %p42 = por %p40, %p41
    %p43 = scmp.ne.s32.totalorder %s35, %s38
    %p44 = scmp.eq.s32.totalorder %s11, 0
    %p45 = por %p43, %p44
    %p46 = scmp.ne.s32.totalorder %s35, %s38
    %p47 = scmp.eq.s32.totalorder %s16, 3
    %p48 = por %p46, %p47
    %p49 = scmp.ne.s32.totalorder %s38, %s39
    %p50 = scmp.eq.s32.totalorder %s16, 0
    %p51 = por %p49, %p50
    %p52 = scmp.ne.s32.totalorder %s38, %s39
    %p53 = scmp.eq.s32.totalorder %s17, 3
    %p54 = por %p52, %p53
    %p56 = scmp.ne.s32.totalorder %s39, %s55
    %p57 = scmp.eq.s32.totalorder %s17, 0
    %p58 = por %p56, %p57
    %s59 = ssub.s32 %s18, %s30
    %p60 = scmp.eq.s32.totalorder %s59, 0
    %s62 = sadd.s32 %s61, 1
    %s63 = scalar_select %p60, %s61, %s62
    %p66 = pneg %p60
    %p67 = scmp.eq.s32.totalorder %s11, 3
    %p68 = por %p66, %p67
    %p69 = scmp.ne.s32.totalorder %s61, %s64
    %p70 = scmp.eq.s32.totalorder %s11, 0
    %p71 = por %p69, %p70
    %p72 = scmp.ne.s32.totalorder %s61, %s64
    %p73 = scmp.eq.s32.totalorder %s16, 3
    %p74 = por %p72, %p73
    %p75 = scmp.ne.s32.totalorder %s64, %s65
    %p76 = scmp.eq.s32.totalorder %s16, 0
    %p77 = por %p75, %p76
    %p78 = scmp.ne.s32.totalorder %s64, %s65
    %p79 = scmp.eq.s32.totalorder %s17, 3
    %p80 = por %p78, %p79
    %p82 = scmp.ne.s32.totalorder %s65, %s81
    %p83 = scmp.eq.s32.totalorder %s17, 0
    %p84 = por %p82, %p83
    %s85 = ssub.s32 %s18, %s30
    %s86 = ssub.s32 %s19, %s26
    %s87 = sor.u32 %s85, %s86
    %p88 = scmp.eq.s32.totalorder %s87, 0
    %s90 = sadd.s32 %s89, 1
    %s91 = scalar_select %p88, %s89, %s90
    %p94 = pneg %p88
    %p95 = scmp.eq.s32.totalorder %s11, 3
    %p96 = por %p94, %p95
    %p97 = scmp.ne.s32.totalorder %s89, %s92
    %p98 = scmp.eq.s32.totalorder %s11, 0
    %p99 = por %p97, %p98
    %p100 = scmp.ne.s32.totalorder %s89, %s92
    %p101 = scmp.eq.s32.totalorder %s16, 3
    %p102 = por %p100, %p101
    %p103 = scmp.ne.s32.totalorder %s92, %s93
    %p104 = scmp.eq.s32.totalorder %s16, 0
    %p105 = por %p103, %p104
    %p106 = scmp.ne.s32.totalorder %s92, %s93
    %p107 = scmp.eq.s32.totalorder %s17, 3
    %p108 = por %p106, %p107
    %p110 = scmp.ne.s32.totalorder %s93, %s109
    %p111 = scmp.eq.s32.totalorder %s17, 0
    %p112 = por %p110, %p111
    %s113 = ssub.s32 %s18, %s30
    %s114 = ssub.s32 %s19, %s26
    %s115 = sor.u32 %s113, %s114
    %p116 = scmp.eq.s32.totalorder %s115, 0
    %s118 = sadd.s32 %s117, 1
    %s119 = scalar_select %p116, %s117, %s118
    %p122 = pneg %p116
    %p123 = scmp.eq.s32.totalorder %s11, 3
    %p124 = por %p122, %p123
    %p125 = scmp.ne.s32.totalorder %s117, %s120
    %p126 = scmp.eq.s32.totalorder %s11, 0
    %p127 = por %p125, %p126
    %p128 = scmp.ne.s32.totalorder %s117, %s120
    %p129 = scmp.eq.s32.totalorder %s16, 3
    %p130 = por %p128, %p129
    %p131 = scmp.ne.s32.totalorder %s120, %s121
    %p132 = scmp.eq.s32.totalorder %s16, 0
    %p133 = por %p131, %p132
    %p134 = scmp.ne.s32.totalorder %s120, %s121
    %p135 = scmp.eq.s32.totalorder %s17, 3
    %p136 = por %p134, %p135
    %p138 = scmp.ne.s32.totalorder %s121, %s137
    %p139 = scmp.eq.s32.totalorder %s17, 0
    %p140 = por %p138, %p139
    %s141 = ssub.s32 %s18, %s30
    %s142 = ssub.s32 %s19, %s26
    %s143 = sor.u32 %s141, %s142
    %p144 = scmp.eq.s32.totalorder %s143, 0
    %s146 = sadd.s32 %s145, 1
    %s147 = scalar_select %p144, %s145, %s146
    %p150 = pneg %p144
    %p151 = scmp.eq.s32.totalorder %s11, 3
    %p152 = por %p150, %p151
    %p153 = scmp.ne.s32.totalorder %s145, %s148
    %p154 = scmp.eq.s32.totalorder %s11, 0
    %p155 = por %p153, %p154
    %p156 = scmp.ne.s32.totalorder %s145, %s148
    %p157 = scmp.eq.s32.totalorder %s16, 3
    %p158 = por %p156, %p157
    %p159 = scmp.ne.s32.totalorder %s148, %s149
    %p160 = scmp.eq.s32.totalorder %s16, 0
    %p161 = por %p159, %p160
    %p162 = scmp.ne.s32.totalorder %s148, %s149
    %p163 = scmp.eq.s32.totalorder %s17, 3
    %p164 = por %p162, %p163
    %p166 = scmp.ne.s32.totalorder %s149, %s165
    %p167 = scmp.eq.s32.totalorder %s17, 0
    %p168 = por %p166, %p167
    %p169 = scmp.le.s32.totalorder 1, %s11
    %p170 = scmp.lt.s32.totalorder %s11, 5
    %p171 = pnand %p169, %p170
    %p172 = pneg %p171
    // Predicated region
    $region9: #{deconv_block.2} parent=5 // pred_check
      _
    $region10: #{deconv_block.2} parent=5 // pred_check_branch
      %174 = sbr.rel (%p171) target = $region12
    $region11: #{deconv_block.2} parent=5 // pred_region
      %s175 = ssub.s32 %s11, 1
    $region12: #{deconv_block.2} parent=5 // pred_fallthru
      _
    %p176 = scmp.lt.s32.totalorder %s11, 4
    // Predicated region
    $region13: #{deconv_block.2} parent=5 // pred_check
      %p177 = pneg %p176
    $region14: #{deconv_block.2} parent=5 // pred_check_branch
      %179 = sbr.rel (%p177) target = $region16
    $region15: #{deconv_block.2} parent=5 // pred_region
      // Predicated region
      $region17: #{deconv_block.2} parent=15 // pred_check
        %p180 = pneg %p45
      $region18: #{deconv_block.2} parent=15 // pred_check_branch
        %182 = sbr.rel (%p180) target = $region20
      $region19: #{deconv_block.2} parent=15 // pred_region
        %s183 = smul.u32 4, %s19
        %p184 = scmp.lt.s32.totalorder %s18, 3
        %s185 = scalar_select %p184, %s18, 3
        %p186 = scmp.lt.s32.totalorder %s183, 3
        %s187 = scalar_select %p186, %s183, 3
        %s188 = smul.addr %s185, 8
        %s189 = sadd.s32 %s187, %s188
        %s190 = smul.addr %s189, 8
        %s191 = scalar_lea.vmem %s0, %s190
        %s192 = smul.u32 4, %s19
      $region20: #{deconv_block.2} parent=15 // pred_fallthru
        _
      // Predicated region
      $region21: #{deconv_block.2} parent=15 // pred_check
        %p193 = pneg %p71
      $region22: #{deconv_block.2} parent=15 // pred_check_branch
        %195 = sbr.rel (%p193) target = $region24
      $region23: #{deconv_block.2} parent=15 // pred_region
        %p196 = scmp.lt.s32.totalorder %s18, 3
        %s197 = scalar_select %p196, %s18, 3
        %s198 = smul.addr %s197, 8
        %s199 = scalar_lea.vmem %s1, %s198
      $region24: #{deconv_block.2} parent=15 // pred_fallthru
        _
    $region16: #{deconv_block.2} parent=5 // pred_fallthru
      _
    %p200 = scmp.le.s32.totalorder 1, %s11
    %p201 = scmp.lt.s32.totalorder %s11, 5
    %p202 = pnand %p200, %p201
    %p203 = pneg %p202
    // Predicated region
    $region25: #{deconv_block.2} parent=5 // pred_check
      _
    $region26: #{deconv_block.2} parent=5 // pred_check_branch
      %205 = sbr.rel (%p202) target = $region28
    $region27: #{deconv_block.2} parent=5 // pred_region
      %s206 = ssub.s32 %s11, 1
      %s207 = smul.u32 4, %s21
      %p208 = scmp.lt.s32.totalorder %s20, 3
      %s209 = scalar_select %p208, %s20, 3
      %p210 = scmp.lt.s32.totalorder %s207, 3
      %s211 = scalar_select %p210, %s207, 3
      %s212 = smul.addr %s209, 8
      %s213 = sadd.s32 %s211, %s212
      %s214 = smul.addr %s213, 8
      %s215 = scalar_lea.vmem %s0, %s214
      %p216 = pneg %p51
      %p217 = pneg %p48
      %p218 = scmp.lt.s32.totalorder %s20, 3
      %s219 = scalar_select %p218, %s20, 3
      %s220 = smul.addr %s219, 8
      %s221 = scalar_lea.vmem %s1, %s220
      %p222 = pneg %p77
      %p223 = pneg %p74
      %p224 = pneg %p105
      %p225 = pneg %p102
      %s226 = smul.u32 4, %s21
      %p227 = scmp.lt.s32.totalorder %s20, 3
      %s228 = scalar_select %p227, %s20, 3
      %p229 = scmp.lt.s32.totalorder %s226, 3
      %s230 = scalar_select %p229, %s226, 3
      %s231 = smul.addr %s228, 4
      %s232 = sadd.s32 %s230, %s231
      %s233 = smul.addr %s232, 8
      %s234 = scalar_lea.vmem %s2, %s233
      %p235 = pneg %p133
      %p236 = pneg %p130
      %p237 = scmp.lt.s32.totalorder %s20, 3
      %s238 = scalar_select %p237, %s20, 3
      %p239 = scmp.lt.s32.totalorder %s21, 0
      %s240 = scalar_select %p239, %s21, 0
      %s241 = sadd.s32 %s240, %s238
      %s242 = smul.addr %s241, 8
      %s243 = scalar_lea.vmem %s3, %s242
      %p244 = pneg %p161
      %p245 = pneg %p158
      %p246 = scmp.lt.s32.totalorder %s20, 3
      %s247 = scalar_select %p246, %s20, 3
      %p248 = scmp.lt.s32.totalorder %s21, 0
      %s249 = scalar_select %p248, %s21, 0
      %s250 = sadd.s32 %s249, %s247
      %s251 = smul.addr %s250, 8
      %s252 = scalar_lea.vmem %s4, %s251
      %s253 = smul.u32 4, %s21
      %p254 = scmp.lt.s32.totalorder %s20, 3
      %s255 = scalar_select %p254, %s20, 3
      %p256 = scmp.lt.s32.totalorder %s253, 3
      %s257 = scalar_select %p256, %s253, 3
      %s258 = smul.addr %s255, 8
      %s259 = sadd.s32 %s257, %s258
      %s260 = smul.addr %s259, 8
      %s261 = scalar_lea.vmem %s0, %s260
      %s262 = smul.u32 4, %s21
      %p263 = scmp.lt.s32.totalorder %s20, 3
      %s264 = scalar_select %p263, %s20, 3
      %s265 = smul.addr %s264, 8
      %s266 = scalar_lea.vmem %s1, %s265
      %s267 = smul.u32 4, %s21
      %p268 = scmp.lt.s32.totalorder %s20, 3
      %s269 = scalar_select %p268, %s20, 3
      %p270 = scmp.lt.s32.totalorder %s267, 3
      %s271 = scalar_select %p270, %s267, 3
      %s272 = smul.addr %s269, 4
      %s273 = sadd.s32 %s271, %s272
      %s274 = smul.addr %s273, 8
      %s275 = scalar_lea.vmem %s2, %s274
      %s276 = smul.u32 4, %s21
      %p277 = scmp.lt.s32.totalorder %s20, 3
      %s278 = scalar_select %p277, %s20, 3
      %p279 = scmp.lt.s32.totalorder %s21, 0
      %s280 = scalar_select %p279, %s21, 0
      %s281 = sadd.s32 %s280, %s278
      %s282 = smul.addr %s281, 8
      %s283 = scalar_lea.vmem %s3, %s282
      %p284 = scmp.lt.s32.totalorder %s20, 3
      %s285 = scalar_select %p284, %s20, 3
      %p286 = scmp.lt.s32.totalorder %s21, 0
      %s287 = scalar_select %p286, %s21, 0
      %s288 = sadd.s32 %s287, %s285
      %s289 = smul.addr %s288, 8
      %s290 = scalar_lea.vmem %s4, %s289
      %v291 = vld [vmem:[%s266] sm:$0xff]
      %v292 = vld [vmem:[%s261] sm:$0xff]
      %v293 = vld [vmem:[%s261 + $0x8] sm:$0xff]
      %v294 = vld [vmem:[%s261 + $0x10] sm:$0xff]
      %v295 = vld [vmem:[%s261 + $0x18] sm:$0xff]
      %v296 = vld [vmem:[%s261 + $0x20] sm:$0xff]
      %v297 = vld [vmem:[%s261 + $0x28] sm:$0xff]
      %v298 = vld [vmem:[%s261 + $0x30] sm:$0xff]
      %v299 = vld [vmem:[%s261 + $0x38] sm:$0xff]
      %vm300 = vcmask 130048
      %v302 = vsel %vm300, %v291, 0
      %304 = vmatpush.msra.mxu0 0.0
      %305 = vmatpush.msra.mxu0 0.0
      %306 = vmatpush.msra.mxu0 0.0
      %307 = vmatpush.msra.mxu0 0.0
      %308 = vmatpush.msra.mxu0 0.0
      %309 = vmatpush.msra.mxu0 0.0
      %310 = vmatpush.msra.mxu0 0.0
      %311 = vmatpush.msra.mxu0 0.0
      %312 = vmatpush.msra.mxu0 0.0
      %313 = vmatpush.msra.mxu0 0.0
      %314 = vmatpush.msra.mxu0 0.0
      %315 = vmatpush.msra.mxu0 0.0
      %316 = vmatpush.msra.mxu0 0.0
      %317 = vmatpush.msra.mxu0 0.0
      %318 = vmatpush.msra.mxu0 %v296
      %319 = vmatpush.msra.mxu0 %v292
      %320 = vmatmul.f32.gmra.mxu0 %v302
      %v321 = vpop.f32.mrf.mxu0
      %v322 = vadd.f32 0.0, %v321
      %323 = vdwg.mxu0
      %324 = vmatpush.msra.mxu0 0.0
      %325 = vmatpush.msra.mxu0 0.0
      %326 = vmatpush.msra.mxu0 0.0
      %327 = vmatpush.msra.mxu0 0.0
      %328 = vmatpush.msra.mxu0 0.0
      %329 = vmatpush.msra.mxu0 0.0
      %330 = vmatpush.msra.mxu0 0.0
      %331 = vmatpush.msra.mxu0 0.0
      %332 = vmatpush.msra.mxu0 0.0
      %333 = vmatpush.msra.mxu0 0.0
      %334 = vmatpush.msra.mxu0 0.0
      %335 = vmatpush.msra.mxu0 0.0
      %336 = vmatpush.msra.mxu0 0.0
      %337 = vmatpush.msra.mxu0 0.0
      %338 = vmatpush.msra.mxu0 %v297
      %339 = vmatpush.msra.mxu0 %v293
      %340 = vmatmul.f32.gmra.mxu0 %v302
      %v341 = vpop.f32.mrf.mxu0
      %v342 = vadd.f32 0.0, %v341
      %343 = vdwg.mxu0
      %344 = vmatpush.msra.mxu0 0.0
      %345 = vmatpush.msra.mxu0 0.0
      %346 = vmatpush.msra.mxu0 0.0
      %347 = vmatpush.msra.mxu0 0.0
      %348 = vmatpush.msra.mxu0 0.0
      %349 = vmatpush.msra.mxu0 0.0
      %350 = vmatpush.msra.mxu0 0.0
      %351 = vmatpush.msra.mxu0 0.0
      %352 = vmatpush.msra.mxu0 0.0
      %353 = vmatpush.msra.mxu0 0.0
      %354 = vmatpush.msra.mxu0 0.0
      %355 = vmatpush.msra.mxu0 0.0
      %356 = vmatpush.msra.mxu0 0.0
      %357 = vmatpush.msra.mxu0 0.0
      %358 = vmatpush.msra.mxu0 %v298
      %359 = vmatpush.msra.mxu0 %v294
      %360 = vmatmul.f32.gmra.mxu0 %v302
      %v361 = vpop.f32.mrf.mxu0
      %v362 = vadd.f32 0.0, %v361
      %363 = vdwg.mxu0
      %364 = vmatpush.msra.mxu0 0.0
      %365 = vmatpush.msra.mxu0 0.0
      %366 = vmatpush.msra.mxu0 0.0
      %367 = vmatpush.msra.mxu0 0.0
      %368 = vmatpush.msra.mxu0 0.0
      %369 = vmatpush.msra.mxu0 0.0
      %370 = vmatpush.msra.mxu0 0.0
      %371 = vmatpush.msra.mxu0 0.0
      %372 = vmatpush.msra.mxu0 0.0
      %373 = vmatpush.msra.mxu0 0.0
      %374 = vmatpush.msra.mxu0 0.0
      %375 = vmatpush.msra.mxu0 0.0
      %376 = vmatpush.msra.mxu0 0.0
      %377 = vmatpush.msra.mxu0 0.0
      %378 = vmatpush.msra.mxu0 %v299
      %379 = vmatpush.msra.mxu0 %v295
      %380 = vmatmul.f32.gmra.mxu0 %v302
      %v381 = vpop.f32.mrf.mxu0
      %v382 = vadd.f32 0.0, %v381
      %383 = vdwg.mxu0
      %384 = vst [vmem:[%s275] sm:$0xff] %v322
      %385 = vst [vmem:[%s275 + $0x8] sm:$0xff] %v342
      %386 = vst [vmem:[%s275 + $0x10] sm:$0xff] %v362
      %387 = vst [vmem:[%s275 + $0x18] sm:$0xff] %v382
      %v388 = vadd.f32 %v322, %v342
      %v389 = vadd.f32 %v388, %v362
      %v390 = vadd.f32 %v389, %v382
      %391 = vadd.xlane.f32.xlu0 %v390
      %v392 = vpop.xlane.xlu0 %391
      %vm393 = vcmask 7168
      %394 = vst.msk [vmem:[%s283] sm:$0xff] %vm393, %v392
      %v395 = vmul.f32 %v322, %v322
      %v396 = vmul.f32 %v342, %v342
      %v397 = vmul.f32 %v362, %v362
      %v398 = vmul.f32 %v382, %v382
      %v399 = vadd.f32 %v395, %v396
      %v400 = vadd.f32 %v399, %v397
      %v401 = vadd.f32 %v400, %v398
      %402 = vadd.xlane.f32.xlu0 %v401
      %v403 = vpop.xlane.xlu0 %402
      %404 = vst.msk [vmem:[%s290] sm:$0xff] %vm393, %v403
      %s405 = smul.u32 4, %s21
      %p406 = scmp.lt.s32.totalorder %s20, 3
      %s407 = scalar_select %p406, %s20, 3
      %p408 = scmp.lt.s32.totalorder %s405, 3
      %s409 = scalar_select %p408, %s405, 3
      %s410 = smul.addr %s407, 4
      %s411 = sadd.s32 %s409, %s410
      %s412 = smul.addr %s411, 8
      %s413 = scalar_lea.vmem %s2, %s412
      %p414 = scmp.lt.s32.totalorder %s20, 3
      %s415 = scalar_select %p414, %s20, 3
      %p416 = scmp.lt.s32.totalorder %s21, 0
      %s417 = scalar_select %p416, %s21, 0
      %s418 = sadd.s32 %s417, %s415
      %s419 = smul.addr %s418, 8
      %s420 = scalar_lea.vmem %s3, %s419
      %p421 = scmp.lt.s32.totalorder %s20, 3
      %s422 = scalar_select %p421, %s20, 3
      %p423 = scmp.lt.s32.totalorder %s21, 0
      %s424 = scalar_select %p423, %s21, 0
      %s425 = sadd.s32 %s424, %s422
      %s426 = smul.addr %s425, 8
      %s427 = scalar_lea.vmem %s4, %s426
      // Predicated region
      $region29: #{deconv_block.2} parent=27 // pred_check
        %p428 = pneg %p102
      $region30: #{deconv_block.2} parent=27 // pred_check_branch
        %430 = sbr.rel (%p428) target = $region32
      $region31: #{deconv_block.2} parent=27 // pred_region
        %s431 = smul.u32 4, %s21
      $region32: #{deconv_block.2} parent=27 // pred_fallthru
        _
      // Predicated region
      $region33: #{deconv_block.2} parent=27 // pred_check
        %p432 = pneg %p130
      $region34: #{deconv_block.2} parent=27 // pred_check_branch
        %434 = sbr.rel (%p432) target = $region36
      $region35: #{deconv_block.2} parent=27 // pred_region
        _
      $region36: #{deconv_block.2} parent=27 // pred_fallthru
        _
      // Predicated region
      $region37: #{deconv_block.2} parent=27 // pred_check
        %p435 = pneg %p158
      $region38: #{deconv_block.2} parent=27 // pred_check_branch
        %437 = sbr.rel (%p435) target = $region40
      $region39: #{deconv_block.2} parent=27 // pred_region
        _
      $region40: #{deconv_block.2} parent=27 // pred_fallthru
        _
    $region28: #{deconv_block.2} parent=5 // pred_fallthru
      _
    %p438 = scmp.le.s32.totalorder 2, %s11
    // Predicated region
    $region41: #{deconv_block.2} parent=5 // pred_check
      %p439 = pneg %p438
    $region42: #{deconv_block.2} parent=5 // pred_check_branch
      %441 = sbr.rel (%p439) target = $region44
    $region43: #{deconv_block.2} parent=5 // pred_region
      %s442 = ssub.s32 %s11, 2
      // Predicated region
      $region45: #{deconv_block.2} parent=43 // pred_check
        %p443 = pneg %p108
      $region46: #{deconv_block.2} parent=43 // pred_check_branch
        %445 = sbr.rel (%p443) target = $region48
      $region47: #{deconv_block.2} parent=43 // pred_region
        %s446 = smul.u32 4, %s23
        %p447 = scmp.lt.s32.totalorder %s22, 3
        %s448 = scalar_select %p447, %s22, 3
        %p449 = scmp.lt.s32.totalorder %s446, 3
        %s450 = scalar_select %p449, %s446, 3
        %s451 = smul.addr %s448, 4
        %s452 = sadd.s32 %s450, %s451
        %s453 = smul.addr %s452, 8
        %s454 = scalar_lea.vmem %s2, %s453
      $region48: #{deconv_block.2} parent=43 // pred_fallthru
        _
      // Predicated region
      $region49: #{deconv_block.2} parent=43 // pred_check
        %p455 = pneg %p136
      $region50: #{deconv_block.2} parent=43 // pred_check_branch
        %457 = sbr.rel (%p455) target = $region52
      $region51: #{deconv_block.2} parent=43 // pred_region
        %p458 = scmp.lt.s32.totalorder %s22, 3
        %s459 = scalar_select %p458, %s22, 3
        %p460 = scmp.lt.s32.totalorder %s23, 0
        %s461 = scalar_select %p460, %s23, 0
        %s462 = sadd.s32 %s461, %s459
        %s463 = smul.addr %s462, 8
        %s464 = scalar_lea.vmem %s3, %s463
      $region52: #{deconv_block.2} parent=43 // pred_fallthru
        _
      // Predicated region
      $region53: #{deconv_block.2} parent=43 // pred_check
        %p465 = pneg %p164
      $region54: #{deconv_block.2} parent=43 // pred_check_branch
        %467 = sbr.rel (%p465) target = $region56
      $region55: #{deconv_block.2} parent=43 // pred_region
        %p468 = scmp.lt.s32.totalorder %s22, 3
        %s469 = scalar_select %p468, %s22, 3
        %p470 = scmp.lt.s32.totalorder %s23, 0
        %s471 = scalar_select %p470, %s23, 0
        %s472 = sadd.s32 %s471, %s469
        %s473 = smul.addr %s472, 8
        %s474 = scalar_lea.vmem %s4, %s473
      $region56: #{deconv_block.2} parent=43 // pred_fallthru
        _
    $region44: #{deconv_block.2} parent=5 // pred_fallthru
      _
  $region6: #{deconv_block.2} parent=0 // loop_footer
    %s15 = sadd.s32 1, %s11
  $region7: #{deconv_block.2} parent=0 // loop_footer_branch
    %10 = sbr.rel target = $region3
  $region8: #{deconv_block.2} parent=0 // loop_exit
    _

</llo_original>
